<compile_context>
chip_gen: v5e
topology: v5e:2x2
jax: 0.10.0
libtpu: 0.0.40
codegen_flags: <defaults>
</compile_context>

<pallas_src>
import math

import jax
import jax.numpy as jnp
from jax.experimental import pallas as pl
from jax.experimental.pallas import tpu as pltpu


# ---------------------------------------------------------------------------
# Generation-aware compiler params
# ---------------------------------------------------------------------------
def _vmem_limit_bytes():
    # ~3/4 of physical VMEM, capped at 64 MiB:
    #   v5e/v6e (128 MiB) -> 64 MiB ; v7x (64 MiB per TC) -> 48 MiB.
    try:
        cap = pltpu.get_tpu_info().vmem_capacity_bytes
        return int(min(64 << 20, (cap * 3) // 4))
    except Exception:          # no TPU / interpret mode: conservative default
        return 48 << 20


_COMPILER_PARAMS = pltpu.CompilerParams(
    dimension_semantics=("parallel", "parallel"),
    vmem_limit_bytes=_vmem_limit_bytes(),
)


# ---------------------------------------------------------------------------
# Kernels
# ---------------------------------------------------------------------------
def _noise_add_kernel(x_ref, std_ref, noise_ref, o_ref):
    """out = x + eff_std * noise, with caller-supplied noise (native dtype)."""
    y = (x_ref[...].astype(jnp.float32)
         + std_ref[...] * noise_ref[...].astype(jnp.float32))
    o_ref[...] = y.astype(o_ref.dtype)


def _noise_rng_kernel(seed_ref, x_ref, std_ref, o_ref):
    """out = x + eff_std * N(0,1); the normal noise is generated on-chip."""
    # Seed the per-tile stream with (seed, i, j) instead of consecutive ints.
    # TODO(synk): stream still depends on the tile shape; use pltpu.sample_block
    #             if bit-stable noise across tile retunes is required.
    pltpu.prng_seed(seed_ref[0], pl.program_id(0), pl.program_id(1))
    noise = pltpu.stateful_normal(x_ref.shape, jnp.float32)   # EUP, no HBM traffic
    # TODO(synk): on v6e/v7x a bf16 draw halves EUP work if it ever binds.
    y = x_ref[...].astype(jnp.float32) + std_ref[...] * noise
    o_ref[...] = y.astype(o_ref.dtype)


# ---------------------------------------------------------------------------
# Tiling helpers
# ---------------------------------------------------------------------------
def _pick_tile(dim, target, align):
    """Largest `align`-multiple <= target, or the full extent if dim <= target."""
    if dim <= target:
        return dim                        # full-extent block is always legal
    return max((target // align) * align, align)


def _tiles_and_grid(b, d, min_itemsize):
    # dtype-aware sublane packing: 8 rows/f32, 16/bf16, 32/int8.
    sub = {4: 8, 2: 16, 1: 32}.get(int(min_itemsize), 8)
    tb = _pick_tile(b, 256, sub)          # row tile
    td = _pick_tile(d, 4096, 128)         # lane-dense column tile (~4 MiB f32)
    # v7x megacore: if the whole array collapsed into a single block but it is
    # big, split the lane axis so both TensorCores get work.
    if b <= tb and d <= td and d % 256 == 0 and b * d * min_itemsize >= (2 << 20):
        td = d // 2
    return tb, td, (pl.cdiv(b, tb), pl.cdiv(d, td))


# ---------------------------------------------------------------------------
# pallas_call wrappers
# ---------------------------------------------------------------------------
def _noise_add_call(x2, std2, noise2, out_dtype):
    b, d = x2.shape
    itemsize = min(x2.dtype.itemsize, noise2.dtype.itemsize,
                   jnp.dtype(out_dtype).itemsize)
    tb, td, grid = _tiles_and_grid(b, d, itemsize)
    cost = pl.CostEstimate(
        flops=2 * b * d,
        transcendentals=0,
        bytes_accessed=int(b * d * (x2.dtype.itemsize
                                    + noise2.dtype.itemsize
                                    + jnp.dtype(out_dtype).itemsize)
                           + std2.size * std2.dtype.itemsize),
    )
    return pl.pallas_call(
        _noise_add_kernel,
        out_shape=jax.ShapeDtypeStruct((b, d), out_dtype),
        grid=grid,
        in_specs=[
            pl.BlockSpec((tb, td), lambda i, j: (i, j)),   # x
            pl.BlockSpec((1, td), lambda i, j: (0, j)),    # eff_std row (f32)
            pl.BlockSpec((tb, td), lambda i, j: (i, j)),   # noise (native dtype)
        ],
        out_specs=pl.BlockSpec((tb, td), lambda i, j: (i, j)),
        compiler_params=_COMPILER_PARAMS,
        cost_estimate=cost,
    )(x2, std2, noise2)


def _noise_rng_call(seed_arr, x2, std2, out_dtype):
    b, d = x2.shape
    itemsize = min(x2.dtype.itemsize, jnp.dtype(out_dtype).itemsize)
    tb, td, grid = _tiles_and_grid(b, d, itemsize)
    cost = pl.CostEstimate(
        flops=2 * b * d,
        transcendentals=2 * b * d,        # normal draws hit the EUP
        bytes_accessed=int(b * d * (x2.dtype.itemsize
                                    + jnp.dtype(out_dtype).itemsize)
                           + std2.size * std2.dtype.itemsize),
    )
    return pl.pallas_call(
        _noise_rng_kernel,
        out_shape=jax.ShapeDtypeStruct((b, d), out_dtype),
        grid_spec=pltpu.PrefetchScalarGridSpec(
            num_scalar_prefetch=1,
            grid=grid,
            in_specs=[
                pl.BlockSpec((tb, td), lambda i, j, seed: (i, j)),   # x
                pl.BlockSpec((1, td), lambda i, j, seed: (0, j)),    # eff_std row
            ],
            out_specs=pl.BlockSpec((tb, td), lambda i, j, seed: (i, j)),
        ),
        compiler_params=_COMPILER_PARAMS,
        cost_estimate=cost,
    )(seed_arr, x2, std2)


def _onchip_rng_supported():
    if not (hasattr(pltpu, "prng_seed") and hasattr(pltpu, "stateful_normal")):
        return False
    try:
        return jax.devices()[0].platform == "tpu"
    except Exception:
        return False


# ---------------------------------------------------------------------------
# Module-equivalent forward
# ---------------------------------------------------------------------------
def noise_layer_forward(x, dimwise_noi_std_pt, unit_std_scale, *,
                        seed=0, noise=None, use_onchip_rng=None):
    """Pallas equivalent of NoiseLayer.forward.

    x                  : (B, ...) input (2-D or 4-D, any trailing dims)
    dimwise_noi_std_pt : per-dim std, broadcastable to x.shape[1:]
    unit_std_scale     : scalar (or broadcastable) scale on the unit-variance noise
    seed               : int seed for the N(0,1) draw when `noise` is None
    noise              : optional explicit samples of m_dist with x's shape
                         (exact-parity / non-Gaussian path)
    use_onchip_rng     : force/forbid the fused on-chip PRNG path (None = auto)
    """
    if x.ndim < 2:
        raise ValueError("x must have a leading batch dimension")
    orig_shape = x.shape
    b = orig_shape[0]
    d = int(math.prod(orig_shape[1:]))

    # Transpose-free flattening: reshape of contiguous (B, C, H, W) is free.
    x2 = x.reshape(b, d)

    # Fold unit_std_scale into the per-dim std once (hoisted out of the grid loop).
    eff_std = jnp.broadcast_to(
        jnp.asarray(dimwise_noi_std_pt, jnp.float32)
        * jnp.asarray(unit_std_scale, jnp.float32),
        orig_shape[1:],
    ).reshape(1, d)

    if noise is not None:
        # Explicit m_dist samples; keep their NATIVE dtype (cast happens in-kernel).
        noise2 = jnp.asarray(noise).reshape(b, d)
        return _noise_add_call(x2, eff_std, noise2, x.dtype).reshape(orig_shape)

    if use_onchip_rng is None:
        use_onchip_rng = _onchip_rng_supported()
    if use_onchip_rng:
        try:
            seed_arr = jnp.asarray([seed], dtype=jnp.int32)
            out2 = jax.block_until_ready(
                _noise_rng_call(seed_arr, x2, eff_std, x.dtype))
            return out2.reshape(orig_shape)
        except Exception:
            # e.g. interpret mode without a prng_seed lowering rule
            pass

    # Host-side N(0,1) fallback (still deterministic in `seed`), drawn in x's
    # dtype so no extra f32 bytes stream through HBM.
    noise2 = jax.random.normal(jax.random.PRNGKey(seed), (b, d), dtype=x.dtype)
    return _noise_add_call(x2, eff_std, noise2, x.dtype).reshape(orig_shape)


# ---------------------------------------------------------------------------
# Self-test
# ---------------------------------------------------------------------------
if __name__ == "__main__":
    key = jax.random.PRNGKey(0)
    k_x4, k_std4, k_n4, k_x2, k_std2, k_n2 = jax.random.split(key, 6)

    scale = jnp.float32(0.5)

    # ---- 4-D input: x (B, C, H, W), DimWise_noi_std_pt (C, H, W) ----
    B, C, H, W = 2, 4, 16, 16
    x4 = jax.random.normal(k_x4, (B, C, H, W), dtype=jnp.float32)
    std4 = jnp.abs(jax.random.normal(k_std4, (C, H, W), dtype=jnp.float32)) * 0.1 + 0.05
    noise4 = jax.random.normal(k_n4, (B, C, H, W), dtype=jnp.float32)

    # (a) explicit-noise path: exact check against the pure-JAX reference
    out4 = jax.block_until_ready(noise_layer_forward(x4, std4, scale, noise=noise4))
    ref4 = x4 + (std4 * scale)[None] * noise4
    assert out4.shape == x4.shape and out4.dtype == x4.dtype
    assert jnp.allclose(out4, ref4, atol=1e-5, rtol=1e-5), "4-D explicit-noise mismatch"

    # (b) sampled path (on-chip RNG on TPU, host fallback otherwise):
    #     deterministic in the seed; recovered noise has N(0,1) statistics
    out4_a = jax.block_until_ready(noise_layer_forward(x4, std4, scale, seed=1234))
    out4_b = jax.block_until_ready(noise_layer_forward(x4, std4, scale, seed=1234))
    assert out4_a.shape == x4.shape and out4_a.dtype == x4.dtype
    assert jnp.array_equal(out4_a, out4_b), "sampled path not deterministic"
    z = (out4_a - x4) / (std4[None] * scale)          # recovered unit-var noise
    assert bool(jnp.all(jnp.isfinite(z)))
    assert abs(float(z.mean())) < 0.2, "sampled noise mean off"
    assert abs(float(z.std()) - 1.0) < 0.2, "sampled noise std off"

    # ---- 2-D f32: x (N, D), DimWise_noi_std_pt (D,) ----
    N, Dh = 8, 32
    x2 = jax.random.normal(k_x2, (N, Dh), dtype=jnp.float32)
    std2 = jnp.abs(jax.random.normal(k_std2, (Dh,), dtype=jnp.float32)) * 0.2 + 0.05
    noise2 = jax.random.normal(k_n2, (N, Dh), dtype=jnp.float32)
    out2 = jax.block_until_ready(noise_layer_forward(x2, std2, scale, noise=noise2))
    ref2 = x2 + (std2 * scale)[None] * noise2
    assert out2.shape == x2.shape
    assert jnp.allclose(out2, ref2, atol=1e-5, rtol=1e-5), "2-D explicit-noise mismatch"

    # ---- 2-D bf16: noise passed in its native dtype (no host-side f32 widening) ----
    xb = x2.astype(jnp.bfloat16)
    nb = noise2.astype(jnp.bfloat16)
    outb = jax.block_until_ready(noise_layer_forward(xb, std2, scale, noise=nb))
    refb = (xb.astype(jnp.float32)
            + (std2 * scale)[None] * nb.astype(jnp.float32)).astype(jnp.bfloat16)
    assert outb.dtype == jnp.bfloat16 and outb.shape == xb.shape
    assert jnp.allclose(outb.astype(jnp.float32), refb.astype(jnp.float32),
                        atol=2e-2, rtol=2e-2), "bf16 explicit-noise mismatch"

    print("KERNEL_OK")
</pallas_src>

<mosaic_0001>
module attributes {stable_mosaic.version = 11 : i64} {
  func.func @_noise_add_kernel(%arg0: i32, %arg1: i32, %arg2: memref<2x1024xf32, #tpu.memory_space<vmem>>, %arg3: memref<1x1024xf32, #tpu.memory_space<vmem>>, %arg4: memref<2x1024xf32, #tpu.memory_space<vmem>>, %arg5: memref<2x1024xf32, #tpu.memory_space<vmem>>) attributes {dimension_semantics = [#tpu.dimension_semantics<parallel>, #tpu.dimension_semantics<parallel>], iteration_bounds = array<i64: 1, 1>, scalar_prefetch = 0 : i64, scratch_operands = 0 : i64, tpu.core_type = #tpu.core_type<tc>, window_params = [{transform_indices = @transform_0, window_bounds = array<i64: 2, 1024>}, {transform_indices = @transform_1, window_bounds = array<i64: 1, 1024>}, {transform_indices = @transform_2, window_bounds = array<i64: 2, 1024>}, {transform_indices = @transform_3, window_bounds = array<i64: 2, 1024>}]} {
    %c0 = arith.constant 0 : index
    %c0_0 = arith.constant 0 : index
    %0 = vector.load %arg2[%c0, %c0_0] : memref<2x1024xf32, #tpu.memory_space<vmem>>, vector<2x1024xf32>
    %c0_1 = arith.constant 0 : index
    %c0_2 = arith.constant 0 : index
    %1 = vector.load %arg3[%c0_1, %c0_2] : memref<1x1024xf32, #tpu.memory_space<vmem>>, vector<1x1024xf32>
    %c0_3 = arith.constant 0 : index
    %c0_4 = arith.constant 0 : index
    %2 = vector.load %arg4[%c0_3, %c0_4] : memref<2x1024xf32, #tpu.memory_space<vmem>>, vector<2x1024xf32>
    %3 = vector.broadcast %1 : vector<1x1024xf32> to vector<2x1024xf32>
    %4 = arith.mulf %3, %2 : vector<2x1024xf32>
    %5 = arith.addf %0, %4 : vector<2x1024xf32>
    %c0_5 = arith.constant 0 : index
    %c0_6 = arith.constant 0 : index
    %6 = vector.load %arg5[%c0_5, %c0_6] : memref<2x1024xf32, #tpu.memory_space<vmem>>, vector<2x1024xf32>
    tpu.vector_store %arg5[%c0_5, %c0_6], %5 {strides = array<i32>} : memref<2x1024xf32, #tpu.memory_space<vmem>>, vector<2x1024xf32>,
    return
  }
  func.func @transform_0(%arg0: i32, %arg1: i32) -> (i32, i32) {
    %c0_i32 = arith.constant 0 : i32
    return %arg0, %arg1 : i32, i32
  }
  func.func @transform_1(%arg0: i32, %arg1: i32) -> (i32, i32) {
    %c0_i32 = arith.constant 0 : i32
    %c0_i32_0 = arith.constant 0 : i32
    return %c0_i32, %arg1 : i32, i32
  }
  func.func @transform_2(%arg0: i32, %arg1: i32) -> (i32, i32) {
    %c0_i32 = arith.constant 0 : i32
    return %arg0, %arg1 : i32, i32
  }
  func.func @transform_3(%arg0: i32, %arg1: i32) -> (i32, i32) {
    %c0_i32 = arith.constant 0 : i32
    return %arg0, %arg1 : i32, i32
  }
}

</mosaic_0001>

<llo_original>
// kernel: tpu_custom_call.1
$region0: #{tpu_custom_call.1}
  #allocation0 [shape = 'u32[]', space=smem, size = 0x4, offset = 0x4, fixed_abs, tag = 'smem constant byte address 0x4 - core index']
  #allocation1 [shape = 'u32[72,128]{1,0:T(1,128)}', space=vmem, size = 0x9000, scoped, tag = 'internal scratch']
  %s0 = inlined_call_operand.hbm [shape: f32[2,1024], index: 0, kind: input, shape index: {}]
  %s1 = inlined_call_operand.hbm [shape: f32[1,1024], index: 1, kind: input, shape index: {}]
  %s2 = inlined_call_operand.hbm [shape: f32[2,1024], index: 2, kind: input, shape index: {}]
  %s3 = inlined_call_operand.hbm [shape: f32[2,1024], index: 3, kind: output, shape index: {}]
  %s4 = sld [smem:[#allocation0]]
  $region34: #{tpu_custom_call.1} parent=0
    _
  %s6 = ssub.s32 1, %s4
  %s7 = scalar_select 0, %s6, %s4
  $region1: #{tpu_custom_call.1} parent=0
    #allocation2 [shape = 'u8[8192]{0}', space=vmem, size = 0x2000, scoped, tag = 'input window, operand 0, single buffered']
    #allocation3 [shape = 's32[1]{0}', space=sflag, size = 0x4, scoped, tag = 'scoped memory for tpu_custom_call.1']
    #allocation4 [shape = 's32[1]{0}', space=sflag, size = 0x4, scoped, tag = 'scoped memory for tpu_custom_call.1']
    #allocation5 [shape = 'u8[4096]{0}', space=vmem, size = 0x1000, scoped, tag = 'input window, operand 1, single buffered']
    #allocation6 [shape = 's32[1]{0}', space=sflag, size = 0x4, scoped, tag = 'scoped memory for tpu_custom_call.1']
    #allocation7 [shape = 'u8[8192]{0}', space=vmem, size = 0x2000, scoped, tag = 'input window, operand 2, single buffered']
    #allocation8 [shape = 'u8[8192]{0}', space=vmem, size = 0x2000, scoped, tag = 'output window, operand 0, single buffered']
    %8 = vsyncpa [#allocation3], 0
    %9 = vsyncpa [#allocation6], 0
    %10 = vsyncpa [#allocation4], 0
    // Predicated region
    $region2: #{tpu_custom_call.1} parent=1 // pred_check
      _
    $region3: #{tpu_custom_call.1} parent=1 // pred_check_branch
      %12 = sbr.rel (0) target = $region5
    $region4: #{tpu_custom_call.1} parent=1 // pred_region
      %14 = vsyncadd [#allocation3], 0
      %s16 = sshll.u32 %s0, 4
      %s17 = int_to_ptr.hbm [resolvable:$true] %s16
      %s18 = sshll.u32 [#allocation2], 4
      %s19 = int_to_ptr.vmem [resolvable:$true] %s18
      %21 = dma.hbm_to_vmem [thread:$0]  %s17, 256, %s19, [#allocation3]
    $region5: #{tpu_custom_call.1} parent=1 // pred_fallthru
      _
    // Predicated region
    $region6: #{tpu_custom_call.1} parent=1 // pred_check
      _
    $region7: #{tpu_custom_call.1} parent=1 // pred_check_branch
      %23 = sbr.rel (0) target = $region9
    $region8: #{tpu_custom_call.1} parent=1 // pred_region
      %25 = vsyncadd [#allocation6], 0
      %s27 = sshll.u32 %s1, 4
      %s28 = int_to_ptr.hbm [resolvable:$true] %s27
      %s29 = sshll.u32 [#allocation5], 4
      %s30 = int_to_ptr.vmem [resolvable:$true] %s29
      %32 = dma.hbm_to_vmem [thread:$0]  %s28, 128, %s30, [#allocation6]
    $region9: #{tpu_custom_call.1} parent=1 // pred_fallthru
      _
    // Predicated region
    $region10: #{tpu_custom_call.1} parent=1 // pred_check
      _
    $region11: #{tpu_custom_call.1} parent=1 // pred_check_branch
      %34 = sbr.rel (0) target = $region13
    $region12: #{tpu_custom_call.1} parent=1 // pred_region
      %36 = vsyncadd [#allocation6], 0
      %s38 = sshll.u32 %s2, 4
      %s39 = int_to_ptr.hbm [resolvable:$true] %s38
      %s40 = sshll.u32 [#allocation7], 4
      %s41 = int_to_ptr.vmem [resolvable:$true] %s40
      %43 = dma.hbm_to_vmem [thread:$0]  %s39, 256, %s41, [#allocation6]
    $region13: #{tpu_custom_call.1} parent=1 // pred_fallthru
      _
    // Predicated region
    $region14: #{tpu_custom_call.1} parent=1 // pred_check
      _
    $region15: #{tpu_custom_call.1} parent=1 // pred_check_branch
      %45 = sbr.rel (0) target = $region17
    $region16: #{tpu_custom_call.1} parent=1 // pred_region
      %47 = dma.done [#allocation3], 256
    $region17: #{tpu_custom_call.1} parent=1 // pred_fallthru
      _
    // Predicated region
    $region18: #{tpu_custom_call.1} parent=1 // pred_check
      _
    $region19: #{tpu_custom_call.1} parent=1 // pred_check_branch
      %49 = sbr.rel (0) target = $region21
    $region20: #{tpu_custom_call.1} parent=1 // pred_region
      %51 = dma.done [#allocation6], 128
    $region21: #{tpu_custom_call.1} parent=1 // pred_fallthru
      _
    // Predicated region
    $region22: #{tpu_custom_call.1} parent=1 // pred_check
      _
    $region23: #{tpu_custom_call.1} parent=1 // pred_check_branch
      %53 = sbr.rel (0) target = $region25
    $region24: #{tpu_custom_call.1} parent=1 // pred_region
      %55 = dma.done [#allocation6], 256
    $region25: #{tpu_custom_call.1} parent=1 // pred_fallthru
      _
    %v56 = vld [vmem:[#allocation2] sm:$0xff]
    %v57 = vld [vmem:[#allocation2 + $0x8] sm:$0xff]
    %v58 = vld [vmem:[#allocation5] sm:$0xff]
    %v59 = vld [vmem:[#allocation7] sm:$0xff]
    %v60 = vld [vmem:[#allocation7 + $0x8] sm:$0xff]
    %v62 = vperm.slane %v58, 0
    %v63 = vperm.slane %v58, 1
    %v64 = vperm.slane %v58, 2
    %v65 = vperm.slane %v58, 3
    %v66 = vperm.slane %v58, 4
    %v67 = vperm.slane %v58, 5
    %v68 = vperm.slane %v58, 6
    %v69 = vperm.slane %v58, 7
    %80 = vst [vmem:[#allocation1] ss:$4 sm:$0xff] %v59
    %s81 = scalar_lea.vmem [#allocation1], 32
    %82 = vst [vmem:[%s81] ss:$4 sm:$0xff] %v60
    %v83 = vld.sshfl [vmem:[#allocation1] sm:$0xff pattern:$0x73625140]
    %v84 = vld.sshfl [vmem:[#allocation1 + $0x8] sm:$0xff pattern:$0x73625140]
    %v85 = vld.sshfl [vmem:[#allocation1 + $0x10] sm:$0xff pattern:$0x73625140]
    %v86 = vld.sshfl [vmem:[#allocation1 + $0x18] sm:$0xff pattern:$0x73625140]
    %v87 = vld.sshfl [vmem:[#allocation1 + $0x20] sm:$0xff pattern:$0x73625140]
    %v88 = vld.sshfl [vmem:[#allocation1 + $0x28] sm:$0xff pattern:$0x73625140]
    %v89 = vld.sshfl [vmem:[#allocation1 + $0x30] sm:$0xff pattern:$0x73625140]
    %v90 = vld.sshfl [vmem:[#allocation1 + $0x38] sm:$0xff pattern:$0x73625140]
    %v99 = vmul.f32 %v62, %v83
    %v100 = vmul.f32 %v63, %v84
    %v101 = vmul.f32 %v64, %v85
    %v102 = vmul.f32 %v65, %v86
    %v103 = vmul.f32 %v66, %v87
    %v104 = vmul.f32 %v67, %v88
    %v105 = vmul.f32 %v68, %v89
    %v106 = vmul.f32 %v69, %v90
    %v115 = vrot.slane %v100, 6
    %v116 = vrot.slane %v101, 4
    %v117 = vrot.slane %v102, 2
    %v118 = vrot.slane %v104, 6
    %v119 = vrot.slane %v105, 4
    %v120 = vrot.slane %v106, 2
    %vm121 = vcmask 1041408
    %v122 = vsel %vm121, %v99, %v115
    %vm123 = vcmask 1045508
    %v124 = vsel %vm123, %v116, %v117
    %vm125 = vcmask 1043456
    %v126 = vsel %vm125, %v122, %v124
    %v127 = vsel %vm121, %v103, %v118
    %v128 = vsel %vm123, %v119, %v120
    %v129 = vsel %vm125, %v127, %v128
    %v132 = vadd.f32 %v56, %v126
    %v133 = vadd.f32 %v57, %v129
    %134 = vst [vmem:[#allocation8] sm:$0xff] %v132
    %135 = vst [vmem:[#allocation8 + $0x8] sm:$0xff] %v133
    // Predicated region
    $region26: #{tpu_custom_call.1} parent=1 // pred_check
      _
    $region27: #{tpu_custom_call.1} parent=1 // pred_check_branch
      %137 = sbr.rel (0) target = $region29
    $region28: #{tpu_custom_call.1} parent=1 // pred_region
      %139 = vsyncadd [#allocation4], 0
      %s141 = sshll.u32 [#allocation8], 4
      %s142 = int_to_ptr.vmem [resolvable:$true] %s141
      %s143 = sshll.u32 %s3, 4
      %s144 = int_to_ptr.hbm [resolvable:$true] %s143
      %146 = dma.vmem_to_hbm [thread:$0]  %s142, 256, %s144, [#allocation4]
    $region29: #{tpu_custom_call.1} parent=1 // pred_fallthru
      _
    // Predicated region
    $region30: #{tpu_custom_call.1} parent=1 // pred_check
      _
    $region31: #{tpu_custom_call.1} parent=1 // pred_check_branch
      %148 = sbr.rel (0) target = $region33
    $region32: #{tpu_custom_call.1} parent=1 // pred_region
      %150 = dma.done [#allocation4], 256
    $region33: #{tpu_custom_call.1} parent=1 // pred_fallthru
      _
    %151 = vsyncpa [#allocation3], 1
    %152 = vsyncpa [#allocation6], 1
    %153 = vsyncpa [#allocation4], 1

</llo_original>
